<compile_context>
chip_gen: v7x
topology: tpu7x:2x2x1
jax: 0.10.0
libtpu: 0.0.40
codegen_flags: <defaults>
</compile_context>

<pallas_src>
import jax
import jax.numpy as jnp
from jax.experimental import pallas as pl
from jax.experimental.pallas import tpu as pltpu

ALPHABET = 26
LANE = 128
SUBLANE = 16  # bf16 vregs pack (16, 128)


def _round_up(x, m):
    return (x + m - 1) // m * m


def hangman_kernel(x_ref, w1_ref, b1_ref, w2_ref, b2_ref, o_ref):
    # fc1: cast x to the weight dtype (bf16) right before the MXU feed,
    # accumulate in f32; bias + ReLU stay on the f32 accumulator.
    x = x_ref[...].astype(w1_ref.dtype)
    h = jnp.dot(x, w1_ref[...], preferred_element_type=jnp.float32)
    h = jnp.maximum(h + b1_ref[...], 0.0)
    # fc2: h -> weight dtype for the MXU feed, f32 accumulation, f32 bias add.
    out = jnp.dot(h.astype(w2_ref.dtype), w2_ref[...],
                  preferred_element_type=jnp.float32)
    o_ref[...] = (out + b2_ref[...]).astype(o_ref.dtype)


def hangman_forward(x, w1, b1, w2, b2, *, batch_tile=4096,
                    compute_dtype=jnp.bfloat16, out_dtype=None):
    """Full MLP forward pass.

    x : [batch, in_dim]            (in_dim = num_letters * 27)
    w1: [in_dim, hidden], b1: [hidden] or [1, hidden]
    w2: [hidden, 26],     b2: [26] or [1, 26]
    Returns [batch, 26] in `out_dtype` (default: compute_dtype = bf16).
    """
    batch, in_dim = x.shape
    hidden = w1.shape[1]
    out_dim = w2.shape[1]
    out_dtype = compute_dtype if out_dtype is None else out_dtype

    b1 = jnp.reshape(b1, (1, -1))
    b2 = jnp.reshape(b2, (1, -1))

    # Lane-dense padded hidden / output dims (zero padding does not change the
    # math: padded hidden units have zero weight + zero bias -> ReLU(0)=0 ->
    # no contribution; padded output columns are sliced off below).
    hid_pad = _round_up(hidden, LANE)
    out_pad = _round_up(out_dim, LANE)

    # Batch tile:
    #   * multiple of 16 (bf16 sublane packing), capped by batch_tile,
    #   * capped so a large batch gives >=2 grid steps (v7x has 2 TensorCores
    #     and shards the "parallel" axis across them only if grid > 1),
    #   * never larger than needed for a tiny batch.
    tile = min(batch_tile,
               _round_up(pl.cdiv(batch, 2), 512),
               _round_up(batch, SUBLANE))
    grid = (pl.cdiv(batch, tile),)  # partial last block is masked by Pallas

    # Weights/biases are tiny (<0.2 MiB): wrapper-side pad/cast is negligible.
    w1p = jnp.pad(w1, ((0, 0), (0, hid_pad - hidden))).astype(compute_dtype)
    b1p = jnp.pad(b1, ((0, 0), (0, hid_pad - hidden))).astype(jnp.float32)
    w2p = jnp.pad(w2, ((0, hid_pad - hidden), (0, out_pad - out_dim))).astype(compute_dtype)
    b2p = jnp.pad(b2, ((0, 0), (0, out_pad - out_dim))).astype(jnp.float32)

    w_bytes = jnp.dtype(compute_dtype).itemsize
    o_bytes = jnp.dtype(out_dtype).itemsize
    cost = pl.CostEstimate(
        flops=2 * batch * (in_dim * hid_pad + hid_pad * out_pad),
        transcendentals=0,
        bytes_accessed=(batch * (in_dim * x.dtype.itemsize + out_pad * o_bytes)
                        + (in_dim * hid_pad + hid_pad * out_pad) * w_bytes
                        + (hid_pad + out_pad) * 4),
    )

    out_padded = pl.pallas_call(
        hangman_kernel,
        out_shape=jax.ShapeDtypeStruct((batch, out_pad), out_dtype),
        grid=grid,
        in_specs=[
            # x: tiled over batch, full (unpadded) feature extent.
            pl.BlockSpec((tile, in_dim), lambda i: (i, 0)),
            # Weights / biases: constant block index -> fetched once, resident.
            pl.BlockSpec((in_dim, hid_pad), lambda i: (0, 0)),
            pl.BlockSpec((1, hid_pad), lambda i: (0, 0)),
            pl.BlockSpec((hid_pad, out_pad), lambda i: (0, 0)),
            pl.BlockSpec((1, out_pad), lambda i: (0, 0)),
        ],
        out_specs=pl.BlockSpec((tile, out_pad), lambda i: (i, 0)),
        compiler_params=pltpu.CompilerParams(
            dimension_semantics=("parallel",),
            vmem_limit_bytes=48 * 1024 * 1024),  # sized against v7x's 64 MiB VMEM
        cost_estimate=cost,
    )(x, w1p, b1p, w2p, b2p)

    # Single slice pass; consumers that can use the padded [batch, out_pad]
    # block (e.g. argmax over the first 26 lanes) should take out_padded directly.
    return out_padded[:, :out_dim]


def init_params(key, num_letters, hidden_size=128, alphabet=ALPHABET,
                dtype=jnp.float32):
    """Deterministic init mimicking nn.Linear defaults (uniform +/- 1/sqrt(fan_in))."""
    in1 = num_letters * (alphabet + 1)
    k1, k2, k3, k4 = jax.random.split(key, 4)
    bound1 = 1.0 / jnp.sqrt(in1)
    bound2 = 1.0 / jnp.sqrt(hidden_size)
    w1 = jax.random.uniform(k1, (in1, hidden_size), dtype, -bound1, bound1)
    b1 = jax.random.uniform(k2, (1, hidden_size), dtype, -bound1, bound1)
    w2 = jax.random.uniform(k3, (hidden_size, alphabet), dtype, -bound2, bound2)
    b2 = jax.random.uniform(k4, (1, alphabet), dtype, -bound2, bound2)
    return w1, b1, w2, b2


if __name__ == "__main__":
    # Small shapes consistent with the module:
    # num_letters=8 -> in_dim = 8*27 = 216, hidden=128 (module default),
    # output=26, batch=4.
    num_letters = 8
    hidden_size = 128
    batch = 4

    key = jax.random.PRNGKey(0)
    kx, kp = jax.random.split(key)
    x = jax.random.normal(kx, (batch, num_letters * (ALPHABET + 1)), jnp.float32)
    w1, b1, w2, b2 = init_params(kp, num_letters, hidden_size)

    out = hangman_forward(x, w1, b1, w2, b2)
    out = jax.block_until_ready(out)
    assert out.shape == (batch, ALPHABET)
    out_f32 = out.astype(jnp.float32)

    # Reference 1: mirror the kernel's bf16 MXU feed (x, w1, h, w2 quantized;
    # f32 accumulation + f32 bias) -> only accumulation order / output-dtype
    # rounding differ.
    q = lambda a: a.astype(jnp.bfloat16).astype(jnp.float32)
    h_ref = jnp.maximum(q(x) @ q(w1) + b1, 0.0)
    ref_q = q(h_ref) @ q(w2) + b2
    assert jnp.allclose(out_f32, ref_q, atol=1e-2, rtol=1e-2)

    # Reference 2: full-precision f32 forward (the PyTorch module's math) ->
    # semantics preserved up to bf16 quantization of the MXU feeds.
    ref = jnp.maximum(x @ w1 + b1, 0.0) @ w2 + b2
    assert jnp.allclose(out_f32, ref, atol=5e-2, rtol=5e-2)

    print("KERNEL_OK")
</pallas_src>

<mosaic_0001>
module attributes {stable_mosaic.version = 11 : i64} {
  func.func @hangman_kernel(%arg0: i32, %arg1: memref<16x216xf32, #tpu.memory_space<vmem>>, %arg2: memref<216x128xbf16, #tpu.memory_space<vmem>>, %arg3: memref<1x128xf32, #tpu.memory_space<vmem>>, %arg4: memref<128x128xbf16, #tpu.memory_space<vmem>>, %arg5: memref<1x128xf32, #tpu.memory_space<vmem>>, %arg6: memref<16x128xbf16, #tpu.memory_space<vmem>>) attributes {dimension_semantics = [#tpu.dimension_semantics<parallel>], iteration_bounds = array<i64: 1>, scalar_prefetch = 0 : i64, scratch_operands = 0 : i64, tpu.core_type = #tpu.core_type<tc>, window_params = [{transform_indices = @transform_0, window_bounds = array<i64: 16, 216>}, {pipeline_mode = #tpu.pipeline_mode<synchronous>, transform_indices = @transform_1, window_bounds = array<i64: 216, 128>}, {pipeline_mode = #tpu.pipeline_mode<synchronous>, transform_indices = @transform_2, window_bounds = array<i64: 1, 128>}, {pipeline_mode = #tpu.pipeline_mode<synchronous>, transform_indices = @transform_3, window_bounds = array<i64: 128, 128>}, {pipeline_mode = #tpu.pipeline_mode<synchronous>, transform_indices = @transform_4, window_bounds = array<i64: 1, 128>}, {transform_indices = @transform_5, window_bounds = array<i64: 16, 128>}]} {
    %c0 = arith.constant 0 : index
    %c0_0 = arith.constant 0 : index
    %0 = vector.load %arg1[%c0, %c0_0] : memref<16x216xf32, #tpu.memory_space<vmem>>, vector<16x216xf32>
    %1 = arith.truncf %0 : vector<16x216xf32> to vector<16x216xbf16>
    %c0_1 = arith.constant 0 : index
    %c0_2 = arith.constant 0 : index
    %2 = vector.load %arg2[%c0_1, %c0_2] : memref<216x128xbf16, #tpu.memory_space<vmem>>, vector<216x128xbf16>
    %cst = arith.constant dense<0.000000e+00> : vector<16x128xf32>
    %3 = tpu.matmul %1, %2, %cst {dimension_numbers = #tpu.dot_dimension_numbers<[1], [0], [0], [1], [0, 0, 1, 1], [], []>} : vector<16x216xbf16>, vector<216x128xbf16>, vector<16x128xf32> -> vector<16x128xf32>
    %c0_3 = arith.constant 0 : index
    %c0_4 = arith.constant 0 : index
    %4 = vector.load %arg3[%c0_3, %c0_4] : memref<1x128xf32, #tpu.memory_space<vmem>>, vector<1x128xf32>
    %5 = vector.broadcast %4 : vector<1x128xf32> to vector<16x128xf32>
    %6 = arith.addf %3, %5 : vector<16x128xf32>
    %cst_5 = arith.constant 0.000000e+00 : f32
    %7 = vector.broadcast %cst_5 : f32 to vector<16x128xf32>
    %8 = arith.maximumf %6, %7 : vector<16x128xf32>
    %9 = arith.truncf %8 : vector<16x128xf32> to vector<16x128xbf16>
    %c0_6 = arith.constant 0 : index
    %c0_7 = arith.constant 0 : index
    %10 = vector.load %arg4[%c0_6, %c0_7] : memref<128x128xbf16, #tpu.memory_space<vmem>>, vector<128x128xbf16>
    %cst_8 = arith.constant dense<0.000000e+00> : vector<16x128xf32>
    %11 = tpu.matmul %9, %10, %cst_8 {dimension_numbers = #tpu.dot_dimension_numbers<[1], [0], [0], [1], [0, 0, 1, 1], [], []>} : vector<16x128xbf16>, vector<128x128xbf16>, vector<16x128xf32> -> vector<16x128xf32>
    %c0_9 = arith.constant 0 : index
    %c0_10 = arith.constant 0 : index
    %12 = vector.load %arg5[%c0_9, %c0_10] : memref<1x128xf32, #tpu.memory_space<vmem>>, vector<1x128xf32>
    %13 = vector.broadcast %12 : vector<1x128xf32> to vector<16x128xf32>
    %14 = arith.addf %11, %13 : vector<16x128xf32>
    %15 = arith.truncf %14 : vector<16x128xf32> to vector<16x128xbf16>
    %c0_11 = arith.constant 0 : index
    %c0_12 = arith.constant 0 : index
    %16 = vector.load %arg6[%c0_11, %c0_12] : memref<16x128xbf16, #tpu.memory_space<vmem>>, vector<16x128xbf16>
    tpu.vector_store %arg6[%c0_11, %c0_12], %15 {strides = array<i32>} : memref<16x128xbf16, #tpu.memory_space<vmem>>, vector<16x128xbf16>,
    return
  }
  func.func @transform_0(%arg0: i32) -> (i32, i32) {
    %c0_i32 = arith.constant 0 : i32
    %c0_i32_0 = arith.constant 0 : i32
    return %arg0, %c0_i32 : i32, i32
  }
  func.func @transform_1(%arg0: i32) -> (i32, i32) {
    %c0_i32 = arith.constant 0 : i32
    %c0_i32_0 = arith.constant 0 : i32
    %c0_i32_1 = arith.constant 0 : i32
    return %c0_i32, %c0_i32_0 : i32, i32
  }
  func.func @transform_2(%arg0: i32) -> (i32, i32) {
    %c0_i32 = arith.constant 0 : i32
    %c0_i32_0 = arith.constant 0 : i32
    %c0_i32_1 = arith.constant 0 : i32
    return %c0_i32, %c0_i32_0 : i32, i32
  }
  func.func @transform_3(%arg0: i32) -> (i32, i32) {
    %c0_i32 = arith.constant 0 : i32
    %c0_i32_0 = arith.constant 0 : i32
    %c0_i32_1 = arith.constant 0 : i32
    return %c0_i32, %c0_i32_0 : i32, i32
  }
  func.func @transform_4(%arg0: i32) -> (i32, i32) {
    %c0_i32 = arith.constant 0 : i32
    %c0_i32_0 = arith.constant 0 : i32
    %c0_i32_1 = arith.constant 0 : i32
    return %c0_i32, %c0_i32_0 : i32, i32
  }
  func.func @transform_5(%arg0: i32) -> (i32, i32) {
    %c0_i32 = arith.constant 0 : i32
    %c0_i32_0 = arith.constant 0 : i32
    return %arg0, %c0_i32 : i32, i32
  }
}

</mosaic_0001>

<llo_original>
// kernel: tpu_custom_call.1
$region0: #{tpu_custom_call.1}
  #allocation0 [shape = 'u32[]', space=smem, size = 0x4, offset = 0x4, fixed_abs, tag = 'smem constant byte address 0x4 - core index']
  #allocation1 [shape = 'u32[144,128]{1,0:T(1,128)}', space=vmem, size = 0x12000, scoped, tag = 'internal scratch']
  %s0 = inlined_call_operand.hbm [shape: f32[4,216], index: 0, kind: input, shape index: {}]
  %s1 = inlined_call_operand.hbm [shape: bf16[216,128], index: 1, kind: input, shape index: {}]
  %s2 = inlined_call_operand.vmem [shape: f32[1,128], index: 2, kind: input, shape index: {}]
  %s3 = inlined_call_operand.hbm [shape: bf16[128,128], index: 3, kind: input, shape index: {}]
  %s4 = inlined_call_operand.vmem [shape: f32[1,128], index: 4, kind: input, shape index: {}]
  %s5 = inlined_call_operand.hbm [shape: bf16[4,128], index: 5, kind: output, shape index: {}]
  %s6 = sld [smem:[#allocation0]]
  $region42: #{tpu_custom_call.1} parent=0
    _
  %s8 = ssub.s32 1, %s6
  %s9 = scalar_select 0, %s8, %s6
  $region1: #{tpu_custom_call.1} parent=0
    #allocation2 [shape = 'u8[16384]{0}', space=vmem, size = 0x4000, scoped, tag = 'input window, operand 0, single buffered']
    #allocation3 [shape = 's32[1]{0}', space=sflag, size = 0x4, scoped, tag = 'scoped memory for tpu_custom_call.1']
    #allocation4 [shape = 's32[1]{0}', space=sflag, size = 0x4, scoped, tag = 'scoped memory for tpu_custom_call.1']
    #allocation5 [shape = 'u8[55296]{0}', space=vmem, size = 0xd800, scoped, tag = 'input window, operand 1, single buffered']
    #allocation6 [shape = 's32[1]{0}', space=sflag, size = 0x4, scoped, tag = 'scoped memory for tpu_custom_call.1']
    #allocation7 [shape = 'u8[32768]{0}', space=vmem, size = 0x8000, scoped, tag = 'input window, operand 3, single buffered']
    #allocation8 [shape = 'u8[4096]{0}', space=vmem, size = 0x1000, scoped, tag = 'output window, operand 0, single buffered']
    %10 = vsyncpa [#allocation3], 0
    %11 = vsyncpa [#allocation6], 0
    %12 = vsyncpa [#allocation4], 0
    // Predicated region
    $region2: #{tpu_custom_call.1} parent=1 // pred_check
      _
    $region3: #{tpu_custom_call.1} parent=1 // pred_check_branch
      %14 = sbr.rel (0) target = $region5
    $region4: #{tpu_custom_call.1} parent=1 // pred_region
      %s16 = ssub.s32 512, 128
      %17 = vsyncadd [#allocation3], %s16
      %s18 = sshll.u32 [#allocation2], 4
      %s19 = int_to_ptr.vmem [resolvable:$true] %s18
      %24 = dma.hbm_to_vmem [thread:$0]  %s0, 128, %s19, [#allocation3], 128, 128, 8
    $region5: #{tpu_custom_call.1} parent=1 // pred_fallthru
      _
    // Predicated region
    $region6: #{tpu_custom_call.1} parent=1 // pred_check
      _
    $region7: #{tpu_custom_call.1} parent=1 // pred_check_branch
      %26 = sbr.rel (0) target = $region9
    $region8: #{tpu_custom_call.1} parent=1 // pred_region
      %s28 = ssub.s32 1728, 1728
      %29 = vsyncadd [#allocation6], %s28
      %s30 = sshll.u32 [#allocation5], 4
      %s31 = int_to_ptr.vmem [resolvable:$true] %s30
      %36 = dma.hbm_to_vmem [thread:$0]  %s1, 1728, %s31, [#allocation6], 64, 64, 4
    $region9: #{tpu_custom_call.1} parent=1 // pred_fallthru
      _
    // Predicated region
    $region10: #{tpu_custom_call.1} parent=1 // pred_check
      _
    $region11: #{tpu_custom_call.1} parent=1 // pred_check_branch
      %38 = sbr.rel (0) target = $region13
    $region12: #{tpu_custom_call.1} parent=1 // pred_region
      _
    $region13: #{tpu_custom_call.1} parent=1 // pred_fallthru
      _
    // Predicated region
    $region14: #{tpu_custom_call.1} parent=1 // pred_check
      _
    $region15: #{tpu_custom_call.1} parent=1 // pred_check_branch
      %40 = sbr.rel (0) target = $region17
    $region16: #{tpu_custom_call.1} parent=1 // pred_region
      %s42 = ssub.s32 1024, 1024
      %43 = vsyncadd [#allocation6], %s42
      %s44 = sshll.u32 [#allocation7], 4
      %s45 = int_to_ptr.vmem [resolvable:$true] %s44
      %50 = dma.hbm_to_vmem [thread:$0]  %s3, 1024, %s45, [#allocation6], 64, 64, 4
    $region17: #{tpu_custom_call.1} parent=1 // pred_fallthru
      _
    // Predicated region
    $region18: #{tpu_custom_call.1} parent=1 // pred_check
      _
    $region19: #{tpu_custom_call.1} parent=1 // pred_check_branch
      %52 = sbr.rel (0) target = $region21
    $region20: #{tpu_custom_call.1} parent=1 // pred_region
      _
    $region21: #{tpu_custom_call.1} parent=1 // pred_fallthru
      _
    // Predicated region
    $region22: #{tpu_custom_call.1} parent=1 // pred_check
      _
    $region23: #{tpu_custom_call.1} parent=1 // pred_check_branch
      %54 = sbr.rel (0) target = $region25
    $region24: #{tpu_custom_call.1} parent=1 // pred_region
      %55 = dma.done [#allocation3], 512
    $region25: #{tpu_custom_call.1} parent=1 // pred_fallthru
      _
    // Predicated region
    $region26: #{tpu_custom_call.1} parent=1 // pred_check
      _
    $region27: #{tpu_custom_call.1} parent=1 // pred_check_branch
      %57 = sbr.rel (0) target = $region29
    $region28: #{tpu_custom_call.1} parent=1 // pred_region
      %58 = dma.done [#allocation6], 1728
    $region29: #{tpu_custom_call.1} parent=1 // pred_fallthru
      _
    // Predicated region
    $region30: #{tpu_custom_call.1} parent=1 // pred_check
      _
    $region31: #{tpu_custom_call.1} parent=1 // pred_check_branch
      %60 = sbr.rel (0) target = $region33
    $region32: #{tpu_custom_call.1} parent=1 // pred_region
      %61 = dma.done [#allocation6], 1024
    $region33: #{tpu_custom_call.1} parent=1 // pred_fallthru
      _
    %v63 = vld [vmem:[#allocation2] sm:$0xff]
    %v64 = vld [vmem:[#allocation2 + $0x8] sm:$0xff]
    %v65 = vld [vmem:[#allocation2 + $0x10] sm:$0xff]
    %v66 = vld [vmem:[#allocation2 + $0x18] sm:$0xff]
    %v71 = vcombine.low %v63, %v64
    %v72 = vcombine.high %v63, %v64
    %v73 = vcombine.low %v65, %v66
    %v74 = vcombine.high %v65, %v66
    %v79 = vpack.c.bf16 %v73, %v71
    %v80 = vpack.c.bf16 %v74, %v72
    %v81 = vld [vmem:[#allocation5] sm:$0xf]
    %v82 = vld [vmem:[#allocation5 + $0x4] sm:$0xf]
    %v83 = vld [vmem:[#allocation5 + $0x8] sm:$0xf]
    %v84 = vld [vmem:[#allocation5 + $0xc] sm:$0xf]
    %v85 = vld [vmem:[#allocation5 + $0x10] sm:$0xf]
    %v86 = vld [vmem:[#allocation5 + $0x14] sm:$0xf]
    %v87 = vld [vmem:[#allocation5 + $0x18] sm:$0xf]
    %v88 = vld [vmem:[#allocation5 + $0x1c] sm:$0xf]
    %v89 = vld [vmem:[#allocation5 + $0x20] sm:$0xf]
    %v90 = vld [vmem:[#allocation5 + $0x24] sm:$0xf]
    %v91 = vld [vmem:[#allocation5 + $0x28] sm:$0xf]
    %v92 = vld [vmem:[#allocation5 + $0x2c] sm:$0xf]
    %v93 = vld [vmem:[#allocation5 + $0x30] sm:$0xf]
    %v94 = vld [vmem:[#allocation5 + $0x34] sm:$0xf]
    %v95 = vld [vmem:[#allocation5 + $0x38] sm:$0xf]
    %v96 = vld [vmem:[#allocation5 + $0x3c] sm:$0xf]
    %v97 = vld [vmem:[#allocation5 + $0x40] sm:$0xf]
    %v98 = vld [vmem:[#allocation5 + $0x44] sm:$0xf]
    %v99 = vld [vmem:[#allocation5 + $0x48] sm:$0xf]
    %v100 = vld [vmem:[#allocation5 + $0x4c] sm:$0xf]
    %v101 = vld [vmem:[#allocation5 + $0x50] sm:$0xf]
    %v102 = vld [vmem:[#allocation5 + $0x54] sm:$0xf]
    %v103 = vld [vmem:[#allocation5 + $0x58] sm:$0xf]
    %v104 = vld [vmem:[#allocation5 + $0x5c] sm:$0xf]
    %v105 = vld [vmem:[#allocation5 + $0x60] sm:$0xf]
    %v106 = vld [vmem:[#allocation5 + $0x64] sm:$0xf]
    %v107 = vld [vmem:[#allocation5 + $0x68] sm:$0xf]
    %v108 = vld [vmem:[%s2] sm:$0x1]
    %v110 = vlaneseq
    %v111 = vshrl.u32 %v110, 7
    %v112 = vsub.s32 0, %v111
    %v113 = vrot.slane %v108, %v112
    %v142 = vunpack.c.l.b16 %v81
    %v143 = vunpack.c.l.b16 %v82
    %v144 = vunpack.c.l.b16 %v83
    %v145 = vunpack.c.l.b16 %v84
    %v146 = vunpack.c.l.b16 %v85
    %v147 = vunpack.c.l.b16 %v86
    %v148 = vunpack.c.l.b16 %v87
    %v149 = vunpack.c.l.b16 %v88
    %v150 = vunpack.c.l.b16 %v89
    %v151 = vunpack.c.l.b16 %v90
    %v152 = vunpack.c.l.b16 %v91
    %v153 = vunpack.c.l.b16 %v92
    %v154 = vunpack.c.l.b16 %v93
    %v155 = vunpack.c.l.b16 %v94
    %v156 = vunpack.c.l.b16 %v95
    %v157 = vunpack.c.l.b16 %v96
    %v158 = vunpack.c.l.b16 %v97
    %v159 = vunpack.c.l.b16 %v98
    %v160 = vunpack.c.l.b16 %v99
    %v161 = vunpack.c.l.b16 %v100
    %v162 = vunpack.c.l.b16 %v101
    %v163 = vunpack.c.l.b16 %v102
    %v164 = vunpack.c.l.b16 %v103
    %v165 = vunpack.c.l.b16 %v104
    %v166 = vunpack.c.l.b16 %v105
    %v167 = vunpack.c.l.b16 %v106
    %v168 = vunpack.c.l.b16 %v107
    %v169 = vpack.c.b16 %v143, %v142
    %v170 = vpack.c.b16 %v145, %v144
    %v171 = vpack.c.b16 %v147, %v146
    %v172 = vpack.c.b16 %v149, %v148
    %v173 = vpack.c.b16 %v151, %v150
    %v174 = vpack.c.b16 %v153, %v152
    %v175 = vpack.c.b16 %v155, %v154
    %v176 = vpack.c.b16 %v157, %v156
    %v177 = vpack.c.b16 %v159, %v158
    %v178 = vpack.c.b16 %v161, %v160
    %v179 = vpack.c.b16 %v163, %v162
    %v180 = vpack.c.b16 %v165, %v164
    %v181 = vpack.c.b16 %v167, %v166
    %v182 = vpack.c.b16 %v168, %v168
    %vm196 = vcmask 719872
    %v198 = vsel %vm196, %v80, 0
    %vm200 = vcmask 1043456
    %v202 = vsel %vm200, %v182, 0
    %204 = vmatprep.subr.bf16.mxu0 0
    %205 = vmatpush1.bf16.msra.mxu0 %v169
    %206 = vmatprep.subr.bf16.mxu0 0
    %207 = vmatpush1.bf16.msra.mxu0 %v170
    %208 = vmatprep.subr.bf16.mxu0 0
    %209 = vmatpush1.bf16.msra.mxu0 %v171
    %210 = vmatprep.subr.bf16.mxu0 0
    %211 = vmatpush1.bf16.msra.mxu0 %v172
    %212 = vmatprep.subr.bf16.mxu0 0
    %213 = vmatpush1.bf16.msra.mxu0 %v173
    %214 = vmatprep.subr.bf16.mxu0 0
    %215 = vmatpush1.bf16.msra.mxu0 %v174
    %216 = vmatprep.subr.bf16.mxu0 0
    %217 = vmatpush1.bf16.msra.mxu0 %v175
    %218 = vmatprep.subr.bf16.mxu0 0
    %219 = vmatpush1.bf16.msra.mxu0 %v176
    %220 = vmatprep.subr.bf16.mxu0 0
    %221 = vmatpush1.bf16.msra.mxu0 %v177
    %222 = vmatprep.subr.bf16.mxu0 0
    %223 = vmatpush1.bf16.msra.mxu0 %v178
    %224 = vmatprep.subr.bf16.mxu0 0
    %225 = vmatpush1.bf16.msra.mxu0 %v179
    %226 = vmatprep.subr.bf16.mxu0 0
    %227 = vmatpush1.bf16.msra.mxu0 %v180
    %228 = vmatprep.subr.bf16.mxu0 0
    %229 = vmatpush1.bf16.msra.mxu0 %v181
    %230 = vmatprep.subr.bf16.mxu0 0
    %231 = vmatpush1.bf16.msra.mxu0 %v202
    %232 = vmatprep.subr.bf16.mxu0 0
    %233 = vmatpush1.bf16.msra.mxu0 0
    %234 = vmatprep.subr.bf16.mxu0 0
    %235 = vmatpush1.bf16.msra.mxu0 0
    %236 = vmatprep.mubr.bf16.mxu0 %v198
    %237 = vmatmul.mubr.bf16.gmra.mrb[0].mxu0 %v79
    %v238 = vpop.f32.mrb[0].mxu0
    %v239 = vadd.f32 %v113, %v238
    %v240 = vpop.f32.mrb[0].mxu0
    %v241 = vpop.f32.mrb[0].mxu0
    %v242 = vadd.f32 %v113, %v241
    %v243 = vpop.f32.mrb[0].mxu0
    %244 = vdwg.mxu0
    %v245 = vmax.f32 %v239, 0.0
    %v246 = vmax.f32 %v242, 0.0
    %v247 = vpack.c.bf16 %v246, %v245
    %v248 = vld [vmem:[#allocation7] sm:$0xf]
    %v249 = vld [vmem:[#allocation7 + $0x4] sm:$0xf]
    %v250 = vld [vmem:[#allocation7 + $0x8] sm:$0xf]
    %v251 = vld [vmem:[#allocation7 + $0xc] sm:$0xf]
    %v252 = vld [vmem:[#allocation7 + $0x10] sm:$0xf]
    %v253 = vld [vmem:[#allocation7 + $0x14] sm:$0xf]
    %v254 = vld [vmem:[#allocation7 + $0x18] sm:$0xf]
    %v255 = vld [vmem:[#allocation7 + $0x1c] sm:$0xf]
    %v256 = vld [vmem:[#allocation7 + $0x20] sm:$0xf]
    %v257 = vld [vmem:[#allocation7 + $0x24] sm:$0xf]
    %v258 = vld [vmem:[#allocation7 + $0x28] sm:$0xf]
    %v259 = vld [vmem:[#allocation7 + $0x2c] sm:$0xf]
    %v260 = vld [vmem:[#allocation7 + $0x30] sm:$0xf]
    %v261 = vld [vmem:[#allocation7 + $0x34] sm:$0xf]
    %v262 = vld [vmem:[#allocation7 + $0x38] sm:$0xf]
    %v263 = vld [vmem:[#allocation7 + $0x3c] sm:$0xf]
    %v264 = vld [vmem:[%s4] sm:$0x1]
    %v266 = vlaneseq
    %v267 = vshrl.u32 %v266, 7
    %v268 = vsub.s32 0, %v267
    %v269 = vrot.slane %v264, %v268
    %v287 = vunpack.c.l.b16 %v248
    %v288 = vunpack.c.l.b16 %v249
    %v289 = vunpack.c.l.b16 %v250
    %v290 = vunpack.c.l.b16 %v251
    %v291 = vunpack.c.l.b16 %v252
    %v292 = vunpack.c.l.b16 %v253
    %v293 = vunpack.c.l.b16 %v254
    %v294 = vunpack.c.l.b16 %v255
    %v295 = vunpack.c.l.b16 %v256
    %v296 = vunpack.c.l.b16 %v257
    %v297 = vunpack.c.l.b16 %v258
    %v298 = vunpack.c.l.b16 %v259
    %v299 = vunpack.c.l.b16 %v260
    %v300 = vunpack.c.l.b16 %v261
    %v301 = vunpack.c.l.b16 %v262
    %v302 = vunpack.c.l.b16 %v263
    %v303 = vpack.c.b16 %v288, %v287
    %v304 = vpack.c.b16 %v290, %v289
    %v305 = vpack.c.b16 %v292, %v291
    %v306 = vpack.c.b16 %v294, %v293
    %v307 = vpack.c.b16 %v296, %v295
    %v308 = vpack.c.b16 %v298, %v297
    %v309 = vpack.c.b16 %v300, %v299
    %v310 = vpack.c.b16 %v302, %v301
    %319 = vmatprep.subr.bf16.mxu0 0
    %320 = vmatpush1.bf16.msra.mxu0 %v303
    %321 = vmatprep.subr.bf16.mxu0 0
    %322 = vmatpush1.bf16.msra.mxu0 %v304
    %323 = vmatprep.subr.bf16.mxu0 0
    %324 = vmatpush1.bf16.msra.mxu0 %v305
    %325 = vmatprep.subr.bf16.mxu0 0
    %326 = vmatpush1.bf16.msra.mxu0 %v306
    %327 = vmatprep.subr.bf16.mxu0 0
    %328 = vmatpush1.bf16.msra.mxu0 %v307
    %329 = vmatprep.subr.bf16.mxu0 0
    %330 = vmatpush1.bf16.msra.mxu0 %v308
    %331 = vmatprep.subr.bf16.mxu0 0
    %332 = vmatpush1.bf16.msra.mxu0 %v309
    %333 = vmatprep.subr.bf16.mxu0 0
    %334 = vmatpush1.bf16.msra.mxu0 %v310
    %335 = vmatprep.subr.bf16.mxu0 0
    %336 = vmatpush1.bf16.msra.mxu0 0
    %337 = vmatprep.subr.bf16.mxu0 0
    %338 = vmatpush1.bf16.msra.mxu0 0
    %339 = vmatprep.subr.bf16.mxu0 0
    %340 = vmatpush1.bf16.msra.mxu0 0
    %341 = vmatprep.subr.bf16.mxu0 0
    %342 = vmatpush1.bf16.msra.mxu0 0
    %343 = vmatprep.subr.bf16.mxu0 0
    %344 = vmatpush1.bf16.msra.mxu0 0
    %345 = vmatprep.subr.bf16.mxu0 0
    %346 = vmatpush1.bf16.msra.mxu0 0
    %347 = vmatprep.subr.bf16.mxu0 0
    %348 = vmatpush1.bf16.msra.mxu0 0
    %349 = vmatprep.subr.bf16.mxu0 0
    %350 = vmatpush1.bf16.msra.mxu0 0
    %351 = vmatprep.mubr.bf16.mxu0 0
    %352 = vmatmul.mubr.bf16.gmra.mrb[0].mxu0 %v247
    %v353 = vpop.f32.mrb[0].mxu0
    %v354 = vadd.f32 %v269, %v353
    %v355 = vpop.f32.mrb[0].mxu0
    %v356 = vpop.f32.mrb[0].mxu0
    %v357 = vadd.f32 %v269, %v356
    %v358 = vpop.f32.mrb[0].mxu0
    %359 = vdwg.mxu0
    %v360 = vpack.c.bf16 %v357, %v354
    %v362 = vcombine.high %v360, %v360
    %v364 = vunpack.c.l.s4 1983009808
    %v365 = vunpack.c.0.s8 %v364
    %v366 = vlaneseq
    %v367 = vshrl.u32 %v366, 7
    %v368 = vsub.s32 %v365, %v367
    %v369 = vrot.slane %v360, %v368
    %v371 = vunpack.c.l.s4 1983009808
    %v372 = vunpack.c.0.s8 %v371
    %v373 = vlaneseq
    %v374 = vshrl.u32 %v373, 7
    %v375 = vsub.s32 %v372, %v374
    %v376 = vrot.slane %v362, %v375
    %v377 = vcombine.high %v369, %v369
    %v378 = vcombine.high %v376, %v376
    %383 = vst [vmem:[#allocation8] sm:$0x3] %v369
    %384 = vst [vmem:[#allocation8 + $0x2] sm:$0x3] %v377
    %385 = vst [vmem:[#allocation8 + $0x4] sm:$0x3] %v376
    %386 = vst [vmem:[#allocation8 + $0x6] sm:$0x3] %v378
    // Predicated region
    $region34: #{tpu_custom_call.1} parent=1 // pred_check
      _
    $region35: #{tpu_custom_call.1} parent=1 // pred_check_branch
      %388 = sbr.rel (0) target = $region37
    $region36: #{tpu_custom_call.1} parent=1 // pred_region
      %s390 = ssub.s32 128, 32
      %391 = vsyncadd [#allocation4], %s390
      %s392 = sshll.u32 [#allocation8], 4
      %s393 = int_to_ptr.vmem [resolvable:$true] %s392
      %398 = dma.vmem_to_hbm [thread:$0]  %s393, 32, %s5, [#allocation4], 32, 32, 2
    $region37: #{tpu_custom_call.1} parent=1 // pred_fallthru
      _
    // Predicated region
    $region38: #{tpu_custom_call.1} parent=1 // pred_check
      _
    $region39: #{tpu_custom_call.1} parent=1 // pred_check_branch
      %400 = sbr.rel (0) target = $region41
    $region40: #{tpu_custom_call.1} parent=1 // pred_region
      %401 = dma.done [#allocation4], 128
    $region41: #{tpu_custom_call.1} parent=1 // pred_fallthru
      _
    %402 = vsyncpa [#allocation3], 1
    %403 = vsyncpa [#allocation6], 1
    %404 = vsyncpa [#allocation4], 1

</llo_original>
